<compile_context>
chip_gen: v7x
topology: tpu7x:2x2x1
jax: 0.10.0
libtpu: 0.0.40
codegen_flags: <defaults>
</compile_context>

<pallas_src>
import functools

import jax
import jax.numpy as jnp
from jax.experimental import pallas as pl
from jax.experimental.pallas import tpu as pltpu

D_MODEL = 512
EPS = 1e-6
DROP_P = 0.1


def _round_up(a, m):
    return (a + m - 1) // m * m


def _cdiv(a, b):
    return (a + b - 1) // b


def _hash_u32(v):
    # SplitMix-style finalizer: xor/shift/mul only (lowers everywhere, no stateful PRNG).
    v = v ^ (v >> jnp.uint32(16))
    v = v * jnp.uint32(0x7FEB352D)
    v = v ^ (v >> jnp.uint32(15))
    v = v * jnp.uint32(0x846CA68B)
    v = v ^ (v >> jnp.uint32(16))
    return v


def _fused_residual_ln_kernel(seed_ref, x_ref, w_ref, pkd_ref, o_ref, *, p, eps, tm, d):
    x = x_ref[...]

    # Fused sublayer Linear(512, 512): bf16 operands on the MXU, f32 accumulation.
    # W is VMEM-resident (constant index map), so sublayer_out never touches HBM.
    y = jnp.dot(x.astype(jnp.bfloat16), w_ref[...],
                preferred_element_type=jnp.float32)

    params = pkd_ref[...].astype(jnp.float32)        # (3, d): bias / gamma / beta
    bias = params[0:1, :]
    gamma = params[1:2, :]
    beta = params[2:3, :]

    y = y + bias

    if p > 0.0:
        # Counter-based dropout: hash of the global element index, computed in uint32
        # so tall inputs (n * 512 > 2^31) cannot overflow an int32 counter.
        i = pl.program_id(0)
        row = jax.lax.broadcasted_iota(jnp.int32, (tm, d), 0).astype(jnp.uint32)
        col = jax.lax.broadcasted_iota(jnp.int32, (tm, d), 1).astype(jnp.uint32)
        row_g = i.astype(jnp.uint32) * jnp.uint32(tm) + row
        gidx = row_g * jnp.uint32(d) + col
        v = gidx + seed_ref[0].astype(jnp.uint32) * jnp.uint32(0x9E3779B9)
        bits = _hash_u32(v)
        threshold = jnp.uint32(min(int(round(p * 4294967296.0)), 0xFFFFFFFF))
        keep = bits >= threshold                      # P(keep) = 1 - p
        y = jnp.where(keep, y * jnp.float32(1.0 / (1.0 - p)), jnp.float32(0.0))

    # Residual add in f32 against the original (un-cast) x.
    h = x.astype(jnp.float32) + y

    # LayerNorm over the last dim (512 lanes).
    mean = jnp.mean(h, axis=-1, keepdims=True)
    c = h - mean
    var = jnp.mean(c * c, axis=-1, keepdims=True)
    inv = jax.lax.rsqrt(var + jnp.float32(eps))

    o_ref[...] = (c * inv * gamma + beta).astype(o_ref.dtype)


def residual_connection(x, w, b, gamma, beta, seed, *, p=DROP_P, eps=EPS,
                        training=True, block_rows=1024):
    """LayerNorm(x + dropout(x @ W + b)) with x: (..., 512).

    Row tiles up to 1024 x 512 (f32 in/out double-buffered ~8 MiB + bf16 W ~1 MiB),
    comfortably inside scoped VMEM on v5e/v6e/v7x. The row grid is "parallel"; when
    more than one block is needed we force >= 2 grid steps so v7x shards across both
    TensorCores.
    """
    # TODO(synk): arbitrary (non-Linear) sublayer modules cannot be fused generically;
    # compute them in JAX and stream their output in place of the in-kernel matmul.
    orig_shape = x.shape
    d = orig_shape[-1]
    assert d == D_MODEL, "LayerNorm normalized_shape is 512"
    xf = x.reshape(-1, d)
    n = xf.shape[0]

    n8 = _round_up(n, 8)                              # multiple of 8 sublanes
    if n8 > d:
        # Ensure at least 2 grid steps so v7x's 2 TensorCores both get work.
        tm = min(block_rows, _round_up(_cdiv(n8, 2), 8))
    else:
        tm = n8
    grid = (_cdiv(n, tm),)                            # ragged last block handled by Pallas

    w_bf16 = w.astype(jnp.bfloat16)                   # bf16 MXU operand, f32 accumulate
    packed = jnp.stack([b, gamma, beta]).astype(jnp.float32)   # (3, d) resident operand
    seed_arr = jnp.asarray([seed], dtype=jnp.int32)

    p_eff = float(p) if training else 0.0
    kernel = functools.partial(_fused_residual_ln_kernel, p=p_eff, eps=eps, tm=tm, d=d)

    out = pl.pallas_call(
        kernel,
        out_shape=jax.ShapeDtypeStruct((n, d), x.dtype),
        grid_spec=pltpu.PrefetchScalarGridSpec(
            num_scalar_prefetch=1,
            grid=grid,
            in_specs=[
                pl.BlockSpec((tm, d), lambda i, seed: (i, 0)),   # x row tile
                pl.BlockSpec((d, d), lambda i, seed: (0, 0)),    # W (bf16, VMEM-resident)
                pl.BlockSpec((3, d), lambda i, seed: (0, 0)),    # packed b/gamma/beta
            ],
            out_specs=pl.BlockSpec((tm, d), lambda i, seed: (i, 0)),
        ),
        compiler_params=pltpu.CompilerParams(
            dimension_semantics=("parallel",),        # no cross-iteration state
            vmem_limit_bytes=32 * 1024 * 1024,
        ),
    )(seed_arr, xf, w_bf16, packed)

    return out.reshape(orig_shape)


if __name__ == "__main__":
    key = jax.random.PRNGKey(0)
    kx, kw, kb = jax.random.split(key, 3)

    B, S, D = 2, 8, D_MODEL
    x = jax.random.normal(kx, (B, S, D), dtype=jnp.float32)

    # LayerNorm(512) params: PyTorch default init (weight=1, bias=0).
    gamma = jnp.ones((D,), dtype=jnp.float32)
    beta = jnp.zeros((D,), dtype=jnp.float32)

    # Deterministic sublayer: Linear(512 -> 512), fused into the kernel.
    w = jax.random.normal(kw, (D, D), dtype=jnp.float32) * (1.0 / jnp.sqrt(D))
    b = jax.random.normal(kb, (D,), dtype=jnp.float32) * 0.01

    # Training mode (dropout active).
    out = residual_connection(x, w, b, gamma, beta, seed=1234,
                              p=DROP_P, eps=EPS, training=True)
    out = jax.block_until_ready(out)
    assert out.shape == x.shape and out.dtype == x.dtype
    assert bool(jnp.all(jnp.isfinite(out)))

    # Eval mode (p=0): compare against a pure-JAX f32 reference (loose tol: bf16 MXU
    # products with f32 accumulation vs full-f32 XLA matmul).
    out_eval = jax.block_until_ready(
        residual_connection(x, w, b, gamma, beta, seed=0, training=False))
    y_ref = jnp.einsum("bsd,de->bse", x, w) + b
    h_ref = x + y_ref
    mu = jnp.mean(h_ref, axis=-1, keepdims=True)
    var = jnp.mean((h_ref - mu) ** 2, axis=-1, keepdims=True)
    ref = (h_ref - mu) / jnp.sqrt(var + EPS) * gamma + beta
    assert bool(jnp.allclose(out_eval, ref, rtol=5e-2, atol=5e-2))

    print("KERNEL_OK")
</pallas_src>

<mosaic_0001>
module attributes {stable_mosaic.version = 11 : i64} {
  func.func @_fused_residual_ln_kernel(%arg0: i32, %arg1: memref<1xi32, #tpu.memory_space<smem>>, %arg2: memref<16x512xf32, #tpu.memory_space<vmem>>, %arg3: memref<512x512xbf16, #tpu.memory_space<vmem>>, %arg4: memref<3x512xf32, #tpu.memory_space<vmem>>, %arg5: memref<16x512xf32, #tpu.memory_space<vmem>>) attributes {dimension_semantics = [#tpu.dimension_semantics<parallel>], iteration_bounds = array<i64: 1>, scalar_prefetch = 1 : i64, scratch_operands = 0 : i64, tpu.core_type = #tpu.core_type<tc>, window_params = [{transform_indices = @transform_0, window_bounds = array<i64: 16, 512>}, {pipeline_mode = #tpu.pipeline_mode<synchronous>, transform_indices = @transform_1, window_bounds = array<i64: 512, 512>}, {pipeline_mode = #tpu.pipeline_mode<synchronous>, transform_indices = @transform_2, window_bounds = array<i64: 3, 512>}, {transform_indices = @transform_3, window_bounds = array<i64: 16, 512>}]} {
    %c0 = arith.constant 0 : index
    %c0_0 = arith.constant 0 : index
    %0 = vector.load %arg2[%c0, %c0_0] : memref<16x512xf32, #tpu.memory_space<vmem>>, vector<16x512xf32>
    %1 = arith.truncf %0 : vector<16x512xf32> to vector<16x512xbf16>
    %c0_1 = arith.constant 0 : index
    %c0_2 = arith.constant 0 : index
    %2 = vector.load %arg3[%c0_1, %c0_2] : memref<512x512xbf16, #tpu.memory_space<vmem>>, vector<512x512xbf16>
    %cst = arith.constant dense<0.000000e+00> : vector<16x512xf32>
    %3 = tpu.matmul %1, %2, %cst {dimension_numbers = #tpu.dot_dimension_numbers<[1], [0], [0], [1], [0, 0, 1, 1], [], []>} : vector<16x512xbf16>, vector<512x512xbf16>, vector<16x512xf32> -> vector<16x512xf32>
    %c0_3 = arith.constant 0 : index
    %c0_4 = arith.constant 0 : index
    %4 = vector.load %arg4[%c0_3, %c0_4] : memref<3x512xf32, #tpu.memory_space<vmem>>, vector<3x512xf32>
    %5 = vector.extract_strided_slice %4 {offsets = [0, 0], sizes = [1, 512], strides = [1, 1]} : vector<3x512xf32> to vector<1x512xf32>
    %6 = vector.extract_strided_slice %4 {offsets = [1, 0], sizes = [1, 512], strides = [1, 1]} : vector<3x512xf32> to vector<1x512xf32>
    %7 = vector.extract_strided_slice %4 {offsets = [2, 0], sizes = [1, 512], strides = [1, 1]} : vector<3x512xf32> to vector<1x512xf32>
    %8 = vector.broadcast %5 : vector<1x512xf32> to vector<16x512xf32>
    %9 = arith.addf %3, %8 : vector<16x512xf32>
    %10 = tpu.iota {dimensions = array<i32: 0>} : vector<16x512xi32>
    %11 = tpu.iota {dimensions = array<i32: 1>} : vector<16x512xi32>
    %c16_i32 = arith.constant 16 : i32
    %12 = arith.muli %arg0, %c16_i32 : i32
    %13 = vector.broadcast %12 : i32 to vector<16x512xi32>
    %14 = arith.addi %13, %10 : vector<16x512xi32>
    %c512_i32 = arith.constant 512 : i32
    %15 = vector.broadcast %c512_i32 : i32 to vector<16x512xi32>
    %16 = arith.muli %14, %15 : vector<16x512xi32>
    %17 = arith.addi %16, %11 : vector<16x512xi32>
    %c0_5 = arith.constant 0 : index
    %18 = memref.load %arg1[%c0_5] : memref<1xi32, #tpu.memory_space<smem>>
    %c-1640531527_i32 = arith.constant -1640531527 : i32
    %19 = arith.muli %18, %c-1640531527_i32 : i32
    %20 = vector.broadcast %19 : i32 to vector<16x512xi32>
    %21 = arith.addi %17, %20 : vector<16x512xi32>
    %c16_i32_6 = arith.constant 16 : i32
    %22 = vector.broadcast %c16_i32_6 : i32 to vector<16x512xi32>
    %23 = arith.shrui %21, %22 : vector<16x512xi32>
    %24 = arith.xori %21, %23 : vector<16x512xi32>
    %c2146121005_i32 = arith.constant 2146121005 : i32
    %25 = vector.broadcast %c2146121005_i32 : i32 to vector<16x512xi32>
    %26 = arith.muli %24, %25 : vector<16x512xi32>
    %c15_i32 = arith.constant 15 : i32
    %27 = vector.broadcast %c15_i32 : i32 to vector<16x512xi32>
    %28 = arith.shrui %26, %27 : vector<16x512xi32>
    %29 = arith.xori %26, %28 : vector<16x512xi32>
    %c-2073254261_i32 = arith.constant -2073254261 : i32
    %30 = vector.broadcast %c-2073254261_i32 : i32 to vector<16x512xi32>
    %31 = arith.muli %29, %30 : vector<16x512xi32>
    %c16_i32_7 = arith.constant 16 : i32
    %32 = vector.broadcast %c16_i32_7 : i32 to vector<16x512xi32>
    %33 = arith.shrui %31, %32 : vector<16x512xi32>
    %34 = arith.xori %31, %33 : vector<16x512xi32>
    %c429496730_i32 = arith.constant 429496730 : i32
    %35 = vector.broadcast %c429496730_i32 : i32 to vector<16x512xi32>
    %36 = arith.cmpi uge, %34, %35 : vector<16x512xi32>
    %cst_8 = arith.constant 1.11111116 : f32
    %37 = vector.broadcast %cst_8 : f32 to vector<16x512xf32>
    %38 = arith.mulf %9, %37 : vector<16x512xf32>
    %cst_9 = arith.constant 0.000000e+00 : f32
    %39 = vector.broadcast %cst_9 : f32 to vector<16x512xf32>
    %40 = arith.select %36, %38, %39 : vector<16x512xi1>, vector<16x512xf32>
    %41 = arith.addf %0, %40 : vector<16x512xf32>
    %cst_10 = arith.constant dense<0.000000e+00> : vector<16xf32>
    %42 = vector.multi_reduction <add>, %41, %cst_10 [1] : vector<16x512xf32> to vector<16xf32>
    %43 = vector.shape_cast %42 : vector<16xf32> to vector<16x1xf32>
    %cst_11 = arith.constant 5.120000e+02 : f32
    %44 = vector.broadcast %cst_11 : f32 to vector<16x1xf32>
    %45 = arith.divf %43, %44 : vector<16x1xf32>
    %46 = vector.broadcast %45 : vector<16x1xf32> to vector<16x512xf32>
    %47 = arith.subf %41, %46 : vector<16x512xf32>
    %48 = arith.mulf %47, %47 : vector<16x512xf32>
    %cst_12 = arith.constant dense<0.000000e+00> : vector<16xf32>
    %49 = vector.multi_reduction <add>, %48, %cst_12 [1] : vector<16x512xf32> to vector<16xf32>
    %50 = vector.shape_cast %49 : vector<16xf32> to vector<16x1xf32>
    %cst_13 = arith.constant 5.120000e+02 : f32
    %51 = vector.broadcast %cst_13 : f32 to vector<16x1xf32>
    %52 = arith.divf %50, %51 : vector<16x1xf32>
    %cst_14 = arith.constant 9.99999997E-7 : f32
    %53 = vector.broadcast %cst_14 : f32 to vector<16x1xf32>
    %54 = arith.addf %52, %53 : vector<16x1xf32>
    %55 = math.rsqrt %54 : vector<16x1xf32>
    %56 = vector.broadcast %55 : vector<16x1xf32> to vector<16x512xf32>
    %57 = arith.mulf %47, %56 : vector<16x512xf32>
    %58 = vector.broadcast %6 : vector<1x512xf32> to vector<16x512xf32>
    %59 = arith.mulf %57, %58 : vector<16x512xf32>
    %60 = vector.broadcast %7 : vector<1x512xf32> to vector<16x512xf32>
    %61 = arith.addf %59, %60 : vector<16x512xf32>
    %c0_15 = arith.constant 0 : index
    %c0_16 = arith.constant 0 : index
    %62 = vector.load %arg5[%c0_15, %c0_16] : memref<16x512xf32, #tpu.memory_space<vmem>>, vector<16x512xf32>
    tpu.vector_store %arg5[%c0_15, %c0_16], %61 {strides = array<i32>} : memref<16x512xf32, #tpu.memory_space<vmem>>, vector<16x512xf32>,
    return
  }
  func.func @transform_0(%arg0: i32, %arg1: memref<1xi32, #tpu.memory_space<smem>>) -> (i32, i32) {
    %c0_i32 = arith.constant 0 : i32
    %c0_i32_0 = arith.constant 0 : i32
    return %arg0, %c0_i32 : i32, i32
  }
  func.func @transform_1(%arg0: i32, %arg1: memref<1xi32, #tpu.memory_space<smem>>) -> (i32, i32) {
    %c0_i32 = arith.constant 0 : i32
    %c0_i32_0 = arith.constant 0 : i32
    %c0_i32_1 = arith.constant 0 : i32
    return %c0_i32, %c0_i32_0 : i32, i32
  }
  func.func @transform_2(%arg0: i32, %arg1: memref<1xi32, #tpu.memory_space<smem>>) -> (i32, i32) {
    %c0_i32 = arith.constant 0 : i32
    %c0_i32_0 = arith.constant 0 : i32
    %c0_i32_1 = arith.constant 0 : i32
    return %c0_i32, %c0_i32_0 : i32, i32
  }
  func.func @transform_3(%arg0: i32, %arg1: memref<1xi32, #tpu.memory_space<smem>>) -> (i32, i32) {
    %c0_i32 = arith.constant 0 : i32
    %c0_i32_0 = arith.constant 0 : i32
    return %arg0, %c0_i32 : i32, i32
  }
}

</mosaic_0001>

<llo_original>
// kernel: tpu_custom_call.1
$region0: #{tpu_custom_call.1}
  #allocation0 [shape = 'u32[]', space=smem, size = 0x4, offset = 0x4, fixed_abs, tag = 'smem constant byte address 0x4 - core index']
  #allocation1 [shape = 'u32[144,128]{1,0:T(1,128)}', space=vmem, size = 0x12000, scoped, tag = 'internal scratch']
  #allocation2 [shape = 's32[1]{0}', space=sflag, size = 0x4, scoped, tag = 'scoped memory for tpu_custom_call.1']
  #allocation3 [shape = 's32[1]{0:T(128)S(6)}', space=smem, size = 0x200, scoped, tag = 'prefetched SMEM operand 0']
  %s0 = inlined_call_operand.<no memory space> [shape: s32[1], index: 0, kind: input, shape index: {}]
  %s1 = inlined_call_operand.hbm [shape: f32[16,512], index: 1, kind: input, shape index: {}]
  %s2 = inlined_call_operand.hbm [shape: bf16[512,512], index: 2, kind: input, shape index: {}]
  %s3 = inlined_call_operand.hbm [shape: f32[3,512], index: 3, kind: input, shape index: {}]
  %s4 = inlined_call_operand.hbm [shape: f32[16,512], index: 4, kind: output, shape index: {}]
  %s5 = sld [smem:[#allocation0]]
  $region34: #{tpu_custom_call.1} parent=0
    _
  %s7 = ssub.s32 1, %s5
  %s8 = scalar_select 0, %s7, %s5
  %9 = sst [smem:[#allocation3]] %s0
  $region1: #{tpu_custom_call.1} parent=0
    #allocation4 [shape = 'u8[32768]{0}', space=vmem, size = 0x8000, scoped, tag = 'input window, operand 1, single buffered']
    #allocation5 [shape = 's32[1]{0}', space=sflag, size = 0x4, scoped, tag = 'scoped memory for tpu_custom_call.1']
    #allocation6 [shape = 's32[1]{0}', space=sflag, size = 0x4, scoped, tag = 'scoped memory for tpu_custom_call.1']
    #allocation7 [shape = 'u8[524288]{0}', space=vmem, size = 0x80000, scoped, tag = 'input window, operand 2, single buffered']
    #allocation8 [shape = 's32[1]{0}', space=sflag, size = 0x4, scoped, tag = 'scoped memory for tpu_custom_call.1']
    #allocation9 [shape = 'u8[8192]{0}', space=vmem, size = 0x2000, scoped, tag = 'input window, operand 3, single buffered']
    #allocation10 [shape = 'u8[32768]{0}', space=vmem, size = 0x8000, scoped, tag = 'output window, operand 0, single buffered']
    %10 = vsyncpa [#allocation5], 0
    %11 = vsyncpa [#allocation8], 0
    %12 = vsyncpa [#allocation6], 0
    // Predicated region
    $region2: #{tpu_custom_call.1} parent=1 // pred_check
      _
    $region3: #{tpu_custom_call.1} parent=1 // pred_check_branch
      %14 = sbr.rel (0) target = $region5
    $region4: #{tpu_custom_call.1} parent=1 // pred_region
      %s16 = ssub.s32 1024, 1024
      %17 = vsyncadd [#allocation5], %s16
      %s18 = sshll.u32 [#allocation4], 4
      %s19 = int_to_ptr.vmem [resolvable:$true] %s18
      %24 = dma.hbm_to_vmem [thread:$0]  %s1, 1024, %s19, [#allocation5], 512, 512, 32
    $region5: #{tpu_custom_call.1} parent=1 // pred_fallthru
      _
    // Predicated region
    $region6: #{tpu_custom_call.1} parent=1 // pred_check
      _
    $region7: #{tpu_custom_call.1} parent=1 // pred_check_branch
      %26 = sbr.rel (0) target = $region9
    $region8: #{tpu_custom_call.1} parent=1 // pred_region
      %s28 = ssub.s32 16384, 16384
      %29 = vsyncadd [#allocation8], %s28
      %s30 = sshll.u32 [#allocation7], 4
      %s31 = int_to_ptr.vmem [resolvable:$true] %s30
      %36 = dma.hbm_to_vmem [thread:$0]  %s2, 16384, %s31, [#allocation8], 256, 256, 16
    $region9: #{tpu_custom_call.1} parent=1 // pred_fallthru
      _
    // Predicated region
    $region10: #{tpu_custom_call.1} parent=1 // pred_check
      _
    $region11: #{tpu_custom_call.1} parent=1 // pred_check_branch
      %38 = sbr.rel (0) target = $region13
    $region12: #{tpu_custom_call.1} parent=1 // pred_region
      %s40 = ssub.s32 256, 256
      %41 = vsyncadd [#allocation8], %s40
      %s43 = sshll.u32 [#allocation9], 4
      %s44 = int_to_ptr.vmem [resolvable:$true] %s43
      %46 = dma.hbm_to_vmem [thread:$0]  %s3, 256, %s44, [#allocation8]
    $region13: #{tpu_custom_call.1} parent=1 // pred_fallthru
      _
    // Predicated region
    $region14: #{tpu_custom_call.1} parent=1 // pred_check
      _
    $region15: #{tpu_custom_call.1} parent=1 // pred_check_branch
      %48 = sbr.rel (0) target = $region17
    $region16: #{tpu_custom_call.1} parent=1 // pred_region
      %49 = dma.done [#allocation5], 1024
    $region17: #{tpu_custom_call.1} parent=1 // pred_fallthru
      _
    // Predicated region
    $region18: #{tpu_custom_call.1} parent=1 // pred_check
      _
    $region19: #{tpu_custom_call.1} parent=1 // pred_check_branch
      %51 = sbr.rel (0) target = $region21
    $region20: #{tpu_custom_call.1} parent=1 // pred_region
      %52 = dma.done [#allocation8], 16384
    $region21: #{tpu_custom_call.1} parent=1 // pred_fallthru
      _
    // Predicated region
    $region22: #{tpu_custom_call.1} parent=1 // pred_check
      _
    $region23: #{tpu_custom_call.1} parent=1 // pred_check_branch
      %54 = sbr.rel (0) target = $region25
    $region24: #{tpu_custom_call.1} parent=1 // pred_region
      %55 = dma.done [#allocation8], 256
    $region25: #{tpu_custom_call.1} parent=1 // pred_fallthru
      _
    %v56 = vld [vmem:[#allocation4] sm:$0xff]
    %v57 = vld [vmem:[#allocation4 + $0x8] sm:$0xff]
    %v58 = vld [vmem:[#allocation4 + $0x10] sm:$0xff]
    %v59 = vld [vmem:[#allocation4 + $0x18] sm:$0xff]
    %v60 = vld [vmem:[#allocation4 + $0x20] sm:$0xff]
    %v61 = vld [vmem:[#allocation4 + $0x28] sm:$0xff]
    %v62 = vld [vmem:[#allocation4 + $0x30] sm:$0xff]
    %v63 = vld [vmem:[#allocation4 + $0x38] sm:$0xff]
    %v64 = vpack.c.bf16 %v60, %v56
    %v65 = vpack.c.bf16 %v61, %v57
    %v66 = vpack.c.bf16 %v62, %v58
    %v67 = vpack.c.bf16 %v63, %v59
    %v68 = vld [vmem:[#allocation7] sm:$0xff]
    %v69 = vld [vmem:[#allocation7 + $0x8] sm:$0xff]
    %v70 = vld [vmem:[#allocation7 + $0x10] sm:$0xff]
    %v71 = vld [vmem:[#allocation7 + $0x18] sm:$0xff]
    %v72 = vld [vmem:[#allocation7 + $0x20] sm:$0xff]
    %v73 = vld [vmem:[#allocation7 + $0x28] sm:$0xff]
    %v74 = vld [vmem:[#allocation7 + $0x30] sm:$0xff]
    %v75 = vld [vmem:[#allocation7 + $0x38] sm:$0xff]
    %v76 = vld [vmem:[#allocation7 + $0x40] sm:$0xff]
    %v77 = vld [vmem:[#allocation7 + $0x48] sm:$0xff]
    %v78 = vld [vmem:[#allocation7 + $0x50] sm:$0xff]
    %v79 = vld [vmem:[#allocation7 + $0x58] sm:$0xff]
    %v80 = vld [vmem:[#allocation7 + $0x60] sm:$0xff]
    %v81 = vld [vmem:[#allocation7 + $0x68] sm:$0xff]
    %v82 = vld [vmem:[#allocation7 + $0x70] sm:$0xff]
    %v83 = vld [vmem:[#allocation7 + $0x78] sm:$0xff]
    %v84 = vld [vmem:[#allocation7 + $0x80] sm:$0xff]
    %v85 = vld [vmem:[#allocation7 + $0x88] sm:$0xff]
    %v86 = vld [vmem:[#allocation7 + $0x90] sm:$0xff]
    %v87 = vld [vmem:[#allocation7 + $0x98] sm:$0xff]
    %v88 = vld [vmem:[#allocation7 + $0xa0] sm:$0xff]
    %v89 = vld [vmem:[#allocation7 + $0xa8] sm:$0xff]
    %v90 = vld [vmem:[#allocation7 + $0xb0] sm:$0xff]
    %v91 = vld [vmem:[#allocation7 + $0xb8] sm:$0xff]
    %v92 = vld [vmem:[#allocation7 + $0xc0] sm:$0xff]
    %v93 = vld [vmem:[#allocation7 + $0xc8] sm:$0xff]
    %v94 = vld [vmem:[#allocation7 + $0xd0] sm:$0xff]
    %v95 = vld [vmem:[#allocation7 + $0xd8] sm:$0xff]
    %v96 = vld [vmem:[#allocation7 + $0xe0] sm:$0xff]
    %v97 = vld [vmem:[#allocation7 + $0xe8] sm:$0xff]
    %v98 = vld [vmem:[#allocation7 + $0xf0] sm:$0xff]
    %v99 = vld [vmem:[#allocation7 + $0xf8] sm:$0xff]
    %v100 = vld [vmem:[#allocation7 + $0x100] sm:$0xff]
    %v101 = vld [vmem:[#allocation7 + $0x108] sm:$0xff]
    %v102 = vld [vmem:[#allocation7 + $0x110] sm:$0xff]
    %v103 = vld [vmem:[#allocation7 + $0x118] sm:$0xff]
    %v104 = vld [vmem:[#allocation7 + $0x120] sm:$0xff]
    %v105 = vld [vmem:[#allocation7 + $0x128] sm:$0xff]
    %v106 = vld [vmem:[#allocation7 + $0x130] sm:$0xff]
    %v107 = vld [vmem:[#allocation7 + $0x138] sm:$0xff]
    %v108 = vld [vmem:[#allocation7 + $0x140] sm:$0xff]
    %v109 = vld [vmem:[#allocation7 + $0x148] sm:$0xff]
    %v110 = vld [vmem:[#allocation7 + $0x150] sm:$0xff]
    %v111 = vld [vmem:[#allocation7 + $0x158] sm:$0xff]
    %v112 = vld [vmem:[#allocation7 + $0x160] sm:$0xff]
    %v113 = vld [vmem:[#allocation7 + $0x168] sm:$0xff]
    %v114 = vld [vmem:[#allocation7 + $0x170] sm:$0xff]
    %v115 = vld [vmem:[#allocation7 + $0x178] sm:$0xff]
    %v116 = vld [vmem:[#allocation7 + $0x180] sm:$0xff]
    %v117 = vld [vmem:[#allocation7 + $0x188] sm:$0xff]
    %v118 = vld [vmem:[#allocation7 + $0x190] sm:$0xff]
    %v119 = vld [vmem:[#allocation7 + $0x198] sm:$0xff]
    %v120 = vld [vmem:[#allocation7 + $0x1a0] sm:$0xff]
    %v121 = vld [vmem:[#allocation7 + $0x1a8] sm:$0xff]
    %v122 = vld [vmem:[#allocation7 + $0x1b0] sm:$0xff]
    %v123 = vld [vmem:[#allocation7 + $0x1b8] sm:$0xff]
    %v124 = vld [vmem:[#allocation7 + $0x1c0] sm:$0xff]
    %v125 = vld [vmem:[#allocation7 + $0x1c8] sm:$0xff]
    %v126 = vld [vmem:[#allocation7 + $0x1d0] sm:$0xff]
    %v127 = vld [vmem:[#allocation7 + $0x1d8] sm:$0xff]
    %v128 = vld [vmem:[#allocation7 + $0x1e0] sm:$0xff]
    %v129 = vld [vmem:[#allocation7 + $0x1e8] sm:$0xff]
    %v130 = vld [vmem:[#allocation7 + $0x1f0] sm:$0xff]
    %v131 = vld [vmem:[#allocation7 + $0x1f8] sm:$0xff]
    %v132 = vld [vmem:[#allocation7 + $0x200] sm:$0xff]
    %v133 = vld [vmem:[#allocation7 + $0x208] sm:$0xff]
    %v134 = vld [vmem:[#allocation7 + $0x210] sm:$0xff]
    %v135 = vld [vmem:[#allocation7 + $0x218] sm:$0xff]
    %v136 = vld [vmem:[#allocation7 + $0x220] sm:$0xff]
    %v137 = vld [vmem:[#allocation7 + $0x228] sm:$0xff]
    %v138 = vld [vmem:[#allocation7 + $0x230] sm:$0xff]
    %v139 = vld [vmem:[#allocation7 + $0x238] sm:$0xff]
    %v140 = vld [vmem:[#allocation7 + $0x240] sm:$0xff]
    %v141 = vld [vmem:[#allocation7 + $0x248] sm:$0xff]
    %v142 = vld [vmem:[#allocation7 + $0x250] sm:$0xff]
    %v143 = vld [vmem:[#allocation7 + $0x258] sm:$0xff]
    %v144 = vld [vmem:[#allocation7 + $0x260] sm:$0xff]
    %v145 = vld [vmem:[#allocation7 + $0x268] sm:$0xff]
    %v146 = vld [vmem:[#allocation7 + $0x270] sm:$0xff]
    %v147 = vld [vmem:[#allocation7 + $0x278] sm:$0xff]
    %v148 = vld [vmem:[#allocation7 + $0x280] sm:$0xff]
    %v149 = vld [vmem:[#allocation7 + $0x288] sm:$0xff]
    %v150 = vld [vmem:[#allocation7 + $0x290] sm:$0xff]
    %v151 = vld [vmem:[#allocation7 + $0x298] sm:$0xff]
    %v152 = vld [vmem:[#allocation7 + $0x2a0] sm:$0xff]
    %v153 = vld [vmem:[#allocation7 + $0x2a8] sm:$0xff]
    %v154 = vld [vmem:[#allocation7 + $0x2b0] sm:$0xff]
    %v155 = vld [vmem:[#allocation7 + $0x2b8] sm:$0xff]
    %v156 = vld [vmem:[#allocation7 + $0x2c0] sm:$0xff]
    %v157 = vld [vmem:[#allocation7 + $0x2c8] sm:$0xff]
    %v158 = vld [vmem:[#allocation7 + $0x2d0] sm:$0xff]
    %v159 = vld [vmem:[#allocation7 + $0x2d8] sm:$0xff]
    %v160 = vld [vmem:[#allocation7 + $0x2e0] sm:$0xff]
    %v161 = vld [vmem:[#allocation7 + $0x2e8] sm:$0xff]
    %v162 = vld [vmem:[#allocation7 + $0x2f0] sm:$0xff]
    %v163 = vld [vmem:[#allocation7 + $0x2f8] sm:$0xff]
    %v164 = vld [vmem:[#allocation7 + $0x300] sm:$0xff]
    %v165 = vld [vmem:[#allocation7 + $0x308] sm:$0xff]
    %v166 = vld [vmem:[#allocation7 + $0x310] sm:$0xff]
    %v167 = vld [vmem:[#allocation7 + $0x318] sm:$0xff]
    %v168 = vld [vmem:[#allocation7 + $0x320] sm:$0xff]
    %v169 = vld [vmem:[#allocation7 + $0x328] sm:$0xff]
    %v170 = vld [vmem:[#allocation7 + $0x330] sm:$0xff]
    %v171 = vld [vmem:[#allocation7 + $0x338] sm:$0xff]
    %v172 = vld [vmem:[#allocation7 + $0x340] sm:$0xff]
    %v173 = vld [vmem:[#allocation7 + $0x348] sm:$0xff]
    %v174 = vld [vmem:[#allocation7 + $0x350] sm:$0xff]
    %v175 = vld [vmem:[#allocation7 + $0x358] sm:$0xff]
    %v176 = vld [vmem:[#allocation7 + $0x360] sm:$0xff]
    %v177 = vld [vmem:[#allocation7 + $0x368] sm:$0xff]
    %v178 = vld [vmem:[#allocation7 + $0x370] sm:$0xff]
    %v179 = vld [vmem:[#allocation7 + $0x378] sm:$0xff]
    %v180 = vld [vmem:[#allocation7 + $0x380] sm:$0xff]
    %v181 = vld [vmem:[#allocation7 + $0x388] sm:$0xff]
    %v182 = vld [vmem:[#allocation7 + $0x390] sm:$0xff]
    %v183 = vld [vmem:[#allocation7 + $0x398] sm:$0xff]
    %v184 = vld [vmem:[#allocation7 + $0x3a0] sm:$0xff]
    %v185 = vld [vmem:[#allocation7 + $0x3a8] sm:$0xff]
    %v186 = vld [vmem:[#allocation7 + $0x3b0] sm:$0xff]
    %v187 = vld [vmem:[#allocation7 + $0x3b8] sm:$0xff]
    %v188 = vld [vmem:[#allocation7 + $0x3c0] sm:$0xff]
    %v189 = vld [vmem:[#allocation7 + $0x3c8] sm:$0xff]
    %v190 = vld [vmem:[#allocation7 + $0x3d0] sm:$0xff]
    %v191 = vld [vmem:[#allocation7 + $0x3d8] sm:$0xff]
    %v192 = vld [vmem:[#allocation7 + $0x3e0] sm:$0xff]
    %v193 = vld [vmem:[#allocation7 + $0x3e8] sm:$0xff]
    %v194 = vld [vmem:[#allocation7 + $0x3f0] sm:$0xff]
    %v195 = vld [vmem:[#allocation7 + $0x3f8] sm:$0xff]
    %v196 = vld [vmem:[#allocation9] sm:$0x77]
    %v197 = vld [vmem:[#allocation9 + $0x8] sm:$0x77]
    %v200 = vlaneseq
    %v201 = vshrl.u32 %v200, 7
    %v202 = vsub.s32 0, %v201
    %v203 = vrot.slane %v196, %v202
    %v204 = vlaneseq
    %v205 = vshrl.u32 %v204, 7
    %v206 = vsub.s32 4, %v205
    %v207 = vrot.slane %v196, %v206
    %v208 = vlaneseq
    %v209 = vshrl.u32 %v208, 7
    %v210 = vsub.s32 0, %v209
    %v211 = vrot.slane %v197, %v210
    %v212 = vlaneseq
    %v213 = vshrl.u32 %v212, 7
    %v214 = vsub.s32 4, %v213
    %v215 = vrot.slane %v197, %v214
    %v220 = vlaneseq
    %v221 = vshrl.u32 %v220, 7
    %v222 = vsub.s32 0, %v221
    %v223 = vrot.slane %v203, %v222
    %v224 = vlaneseq
    %v225 = vshrl.u32 %v224, 7
    %v226 = vsub.s32 0, %v225
    %v227 = vrot.slane %v207, %v226
    %v228 = vlaneseq
    %v229 = vshrl.u32 %v228, 7
    %v230 = vsub.s32 0, %v229
    %v231 = vrot.slane %v211, %v230
    %v232 = vlaneseq
    %v233 = vshrl.u32 %v232, 7
    %v234 = vsub.s32 0, %v233
    %v235 = vrot.slane %v215, %v234
    %v364 = vunpack.c.l.b16 %v68
    %v365 = vunpack.c.h.b16 %v68
    %v366 = vunpack.c.l.b16 %v69
    %v367 = vunpack.c.h.b16 %v69
    %v368 = vunpack.c.l.b16 %v70
    %v369 = vunpack.c.h.b16 %v70
    %v370 = vunpack.c.l.b16 %v71
    %v371 = vunpack.c.h.b16 %v71
    %v372 = vunpack.c.l.b16 %v72
    %v373 = vunpack.c.h.b16 %v72
    %v374 = vunpack.c.l.b16 %v73
    %v375 = vunpack.c.h.b16 %v73
    %v376 = vunpack.c.l.b16 %v74
    %v377 = vunpack.c.h.b16 %v74
    %v378 = vunpack.c.l.b16 %v75
    %v379 = vunpack.c.h.b16 %v75
    %v380 = vunpack.c.l.b16 %v76
    %v381 = vunpack.c.h.b16 %v76
    %v382 = vunpack.c.l.b16 %v77
    %v383 = vunpack.c.h.b16 %v77
    %v384 = vunpack.c.l.b16 %v78
    %v385 = vunpack.c.h.b16 %v78
    %v386 = vunpack.c.l.b16 %v79
    %v387 = vunpack.c.h.b16 %v79
    %v388 = vunpack.c.l.b16 %v80
    %v389 = vunpack.c.h.b16 %v80
    %v390 = vunpack.c.l.b16 %v81
    %v391 = vunpack.c.h.b16 %v81
    %v392 = vunpack.c.l.b16 %v82
    %v393 = vunpack.c.h.b16 %v82
    %v394 = vunpack.c.l.b16 %v83
    %v395 = vunpack.c.h.b16 %v83
    %v396 = vunpack.c.l.b16 %v84
    %v397 = vunpack.c.h.b16 %v84
    %v398 = vunpack.c.l.b16 %v85
    %v399 = vunpack.c.h.b16 %v85
    %v400 = vunpack.c.l.b16 %v86
    %v401 = vunpack.c.h.b16 %v86
    %v402 = vunpack.c.l.b16 %v87
    %v403 = vunpack.c.h.b16 %v87
    %v404 = vunpack.c.l.b16 %v88
    %v405 = vunpack.c.h.b16 %v88
    %v406 = vunpack.c.l.b16 %v89
    %v407 = vunpack.c.h.b16 %v89
    %v408 = vunpack.c.l.b16 %v90
    %v409 = vunpack.c.h.b16 %v90
    %v410 = vunpack.c.l.b16 %v91
    %v411 = vunpack.c.h.b16 %v91
    %v412 = vunpack.c.l.b16 %v92
    %v413 = vunpack.c.h.b16 %v92
    %v414 = vunpack.c.l.b16 %v93
    %v415 = vunpack.c.h.b16 %v93
    %v416 = vunpack.c.l.b16 %v94
    %v417 = vunpack.c.h.b16 %v94
    %v418 = vunpack.c.l.b16 %v95
    %v419 = vunpack.c.h.b16 %v95
    %v420 = vunpack.c.l.b16 %v96
    %v421 = vunpack.c.h.b16 %v96
    %v422 = vunpack.c.l.b16 %v97
    %v423 = vunpack.c.h.b16 %v97
    %v424 = vunpack.c.l.b16 %v98
    %v425 = vunpack.c.h.b16 %v98
    %v426 = vunpack.c.l.b16 %v99
    %v427 = vunpack.c.h.b16 %v99
    %v428 = vunpack.c.l.b16 %v100
    %v429 = vunpack.c.h.b16 %v100
    %v430 = vunpack.c.l.b16 %v101
    %v431 = vunpack.c.h.b16 %v101
    %v432 = vunpack.c.l.b16 %v102
    %v433 = vunpack.c.h.b16 %v102
    %v434 = vunpack.c.l.b16 %v103
    %v435 = vunpack.c.h.b16 %v103
    %v436 = vunpack.c.l.b16 %v104
    %v437 = vunpack.c.h.b16 %v104
    %v438 = vunpack.c.l.b16 %v105
    %v439 = vunpack.c.h.b16 %v105
    %v440 = vunpack.c.l.b16 %v106
    %v441 = vunpack.c.h.b16 %v106
    %v442 = vunpack.c.l.b16 %v107
    %v443 = vunpack.c.h.b16 %v107
    %v444 = vunpack.c.l.b16 %v108
    %v445 = vunpack.c.h.b16 %v108
    %v446 = vunpack.c.l.b16 %v109
    %v447 = vunpack.c.h.b16 %v109
    %v448 = vunpack.c.l.b16 %v110
    %v449 = vunpack.c.h.b16 %v110
    %v450 = vunpack.c.l.b16 %v111
    %v451 = vunpack.c.h.b16 %v111
    %v452 = vunpack.c.l.b16 %v112
    %v453 = vunpack.c.h.b16 %v112
    %v454 = vunpack.c.l.b16 %v113
    %v455 = vunpack.c.h.b16 %v113
    %v456 = vunpack.c.l.b16 %v114
    %v457 = vunpack.c.h.b16 %v114
    %v458 = vunpack.c.l.b16 %v115
    %v459 = vunpack.c.h.b16 %v115
    %v460 = vunpack.c.l.b16 %v116
    %v461 = vunpack.c.h.b16 %v116
    %v462 = vunpack.c.l.b16 %v117
    %v463 = vunpack.c.h.b16 %v117
    %v464 = vunpack.c.l.b16 %v118
    %v465 = vunpack.c.h.b16 %v118
    %v466 = vunpack.c.l.b16 %v119
    %v467 = vunpack.c.h.b16 %v119
    %v468 = vunpack.c.l.b16 %v120
    %v469 = vunpack.c.h.b16 %v120
    %v470 = vunpack.c.l.b16 %v121
    %v471 = vunpack.c.h.b16 %v121
    %v472 = vunpack.c.l.b16 %v122
    %v473 = vunpack.c.h.b16 %v122
    %v474 = vunpack.c.l.b16 %v123
    %v475 = vunpack.c.h.b16 %v123
    %v476 = vunpack.c.l.b16 %v124
    %v477 = vunpack.c.h.b16 %v124
    %v478 = vunpack.c.l.b16 %v125
    %v479 = vunpack.c.h.b16 %v125
    %v480 = vunpack.c.l.b16 %v126
    %v481 = vunpack.c.h.b16 %v126
    %v482 = vunpack.c.l.b16 %v127
    %v483 = vunpack.c.h.b16 %v127
    %v484 = vunpack.c.l.b16 %v128
    %v485 = vunpack.c.h.b16 %v128
    %v486 = vunpack.c.l.b16 %v129
    %v487 = vunpack.c.h.b16 %v129
    %v488 = vunpack.c.l.b16 %v130
    %v489 = vunpack.c.h.b16 %v130
    %v490 = vunpack.c.l.b16 %v131
    %v491 = vunpack.c.h.b16 %v131
    %v492 = vunpack.c.l.b16 %v132
    %v493 = vunpack.c.h.b16 %v132
    %v494 = vunpack.c.l.b16 %v133
    %v495 = vunpack.c.h.b16 %v133
    %v496 = vunpack.c.l.b16 %v134
    %v497 = vunpack.c.h.b16 %v134
    %v498 = vunpack.c.l.b16 %v135
    %v499 = vunpack.c.h.b16 %v135
    %v500 = vunpack.c.l.b16 %v136
    %v501 = vunpack.c.h.b16 %v136
    %v502 = vunpack.c.l.b16 %v137
    %v503 = vunpack.c.h.b16 %v137
    %v504 = vunpack.c.l.b16 %v138
    %v505 = vunpack.c.h.b16 %v138
    %v506 = vunpack.c.l.b16 %v139
    %v507 = vunpack.c.h.b16 %v139
    %v508 = vunpack.c.l.b16 %v140
    %v509 = vunpack.c.h.b16 %v140
    %v510 = vunpack.c.l.b16 %v141
    %v511 = vunpack.c.h.b16 %v141
    %v512 = vunpack.c.l.b16 %v142
    %v513 = vunpack.c.h.b16 %v142
    %v514 = vunpack.c.l.b16 %v143
    %v515 = vunpack.c.h.b16 %v143
    %v516 = vunpack.c.l.b16 %v144
    %v517 = vunpack.c.h.b16 %v144
    %v518 = vunpack.c.l.b16 %v145
    %v519 = vunpack.c.h.b16 %v145
    %v520 = vunpack.c.l.b16 %v146
    %v521 = vunpack.c.h.b16 %v146
    %v522 = vunpack.c.l.b16 %v147
    %v523 = vunpack.c.h.b16 %v147
    %v524 = vunpack.c.l.b16 %v148
    %v525 = vunpack.c.h.b16 %v148
    %v526 = vunpack.c.l.b16 %v149
    %v527 = vunpack.c.h.b16 %v149
    %v528 = vunpack.c.l.b16 %v150
    %v529 = vunpack.c.h.b16 %v150
    %v530 = vunpack.c.l.b16 %v151
    %v531 = vunpack.c.h.b16 %v151
    %v532 = vunpack.c.l.b16 %v152
    %v533 = vunpack.c.h.b16 %v152
    %v534 = vunpack.c.l.b16 %v153
    %v535 = vunpack.c.h.b16 %v153
    %v536 = vunpack.c.l.b16 %v154
    %v537 = vunpack.c.h.b16 %v154
    %v538 = vunpack.c.l.b16 %v155
    %v539 = vunpack.c.h.b16 %v155
    %v540 = vunpack.c.l.b16 %v156
    %v541 = vunpack.c.h.b16 %v156
    %v542 = vunpack.c.l.b16 %v157
    %v543 = vunpack.c.h.b16 %v157
    %v544 = vunpack.c.l.b16 %v158
    %v545 = vunpack.c.h.b16 %v158
    %v546 = vunpack.c.l.b16 %v159
    %v547 = vunpack.c.h.b16 %v159
    %v548 = vunpack.c.l.b16 %v160
    %v549 = vunpack.c.h.b16 %v160
    %v550 = vunpack.c.l.b16 %v161
    %v551 = vunpack.c.h.b16 %v161
    %v552 = vunpack.c.l.b16 %v162
    %v553 = vunpack.c.h.b16 %v162
    %v554 = vunpack.c.l.b16 %v163
    %v555 = vunpack.c.h.b16 %v163
    %v556 = vunpack.c.l.b16 %v164
    %v557 = vunpack.c.h.b16 %v164
    %v558 = vunpack.c.l.b16 %v165
    %v559 = vunpack.c.h.b16 %v165
    %v560 = vunpack.c.l.b16 %v166
    %v561 = vunpack.c.h.b16 %v166
    %v562 = vunpack.c.l.b16 %v167
    %v563 = vunpack.c.h.b16 %v167
    %v564 = vunpack.c.l.b16 %v168
    %v565 = vunpack.c.h.b16 %v168
    %v566 = vunpack.c.l.b16 %v169
    %v567 = vunpack.c.h.b16 %v169
    %v568 = vunpack.c.l.b16 %v170
    %v569 = vunpack.c.h.b16 %v170
    %v570 = vunpack.c.l.b16 %v171
    %v571 = vunpack.c.h.b16 %v171
    %v572 = vunpack.c.l.b16 %v172
    %v573 = vunpack.c.h.b16 %v172
    %v574 = vunpack.c.l.b16 %v173
    %v575 = vunpack.c.h.b16 %v173
    %v576 = vunpack.c.l.b16 %v174
    %v577 = vunpack.c.h.b16 %v174
    %v578 = vunpack.c.l.b16 %v175
    %v579 = vunpack.c.h.b16 %v175
    %v580 = vunpack.c.l.b16 %v176
    %v581 = vunpack.c.h.b16 %v176
    %v582 = vunpack.c.l.b16 %v177
    %v583 = vunpack.c.h.b16 %v177
    %v584 = vunpack.c.l.b16 %v178
    %v585 = vunpack.c.h.b16 %v178
    %v586 = vunpack.c.l.b16 %v179
    %v587 = vunpack.c.h.b16 %v179
    %v588 = vunpack.c.l.b16 %v180
    %v589 = vunpack.c.h.b16 %v180
    %v590 = vunpack.c.l.b16 %v181
    %v591 = vunpack.c.h.b16 %v181
    %v592 = vunpack.c.l.b16 %v182
    %v593 = vunpack.c.h.b16 %v182
    %v594 = vunpack.c.l.b16 %v183
    %v595 = vunpack.c.h.b16 %v183
    %v596 = vunpack.c.l.b16 %v184
    %v597 = vunpack.c.h.b16 %v184
    %v598 = vunpack.c.l.b16 %v185
    %v599 = vunpack.c.h.b16 %v185
    %v600 = vunpack.c.l.b16 %v186
    %v601 = vunpack.c.h.b16 %v186
    %v602 = vunpack.c.l.b16 %v187
    %v603 = vunpack.c.h.b16 %v187
    %v604 = vunpack.c.l.b16 %v188
    %v605 = vunpack.c.h.b16 %v188
    %v606 = vunpack.c.l.b16 %v189
    %v607 = vunpack.c.h.b16 %v189
    %v608 = vunpack.c.l.b16 %v190
    %v609 = vunpack.c.h.b16 %v190
    %v610 = vunpack.c.l.b16 %v191
    %v611 = vunpack.c.h.b16 %v191
    %v612 = vunpack.c.l.b16 %v192
    %v613 = vunpack.c.h.b16 %v192
    %v614 = vunpack.c.l.b16 %v193
    %v615 = vunpack.c.h.b16 %v193
    %v616 = vunpack.c.l.b16 %v194
    %v617 = vunpack.c.h.b16 %v194
    %v618 = vunpack.c.l.b16 %v195
    %v619 = vunpack.c.h.b16 %v195
    %v620 = vpack.c.b16 %v368, %v364
    %v621 = vpack.c.b16 %v369, %v365
    %v622 = vpack.c.b16 %v370, %v366
    %v623 = vpack.c.b16 %v371, %v367
    %v624 = vpack.c.b16 %v376, %v372
    %v625 = vpack.c.b16 %v377, %v373
    %v626 = vpack.c.b16 %v378, %v374
    %v627 = vpack.c.b16 %v379, %v375
    %v628 = vpack.c.b16 %v384, %v380
    %v629 = vpack.c.b16 %v385, %v381
    %v630 = vpack.c.b16 %v386, %v382
    %v631 = vpack.c.b16 %v387, %v383
    %v632 = vpack.c.b16 %v392, %v388
    %v633 = vpack.c.b16 %v393, %v389
    %v634 = vpack.c.b16 %v394, %v390
    %v635 = vpack.c.b16 %v395, %v391
    %v636 = vpack.c.b16 %v400, %v396
    %v637 = vpack.c.b16 %v401, %v397
    %v638 = vpack.c.b16 %v402, %v398
    %v639 = vpack.c.b16 %v403, %v399
    %v640 = vpack.c.b16 %v408, %v404
    %v641 = vpack.c.b16 %v409, %v405
    %v642 = vpack.c.b16 %v410, %v406
    %v643 = vpack.c.b16 %v411, %v407
    %v644 = vpack.c.b16 %v416, %v412
    %v645 = vpack.c.b16 %v417, %v413
    %v646 = vpack.c.b16 %v418, %v414
    %v647 = vpack.c.b16 %v419, %v415
    %v648 = vpack.c.b16 %v424, %v420
    %v649 = vpack.c.b16 %v425, %v421
    %v650 = vpack.c.b16 %v426, %v422
    %v651 = vpack.c.b16 %v427, %v423
    %v652 = vpack.c.b16 %v432, %v428
    %v653 = vpack.c.b16 %v433, %v429
    %v654 = vpack.c.b16 %v434, %v430
    %v655 = vpack.c.b16 %v435, %v431
    %v656 = vpack.c.b16 %v440, %v436
    %v657 = vpack.c.b16 %v441, %v437
    %v658 = vpack.c.b16 %v442, %v438
    %v659 = vpack.c.b16 %v443, %v439
    %v660 = vpack.c.b16 %v448, %v444
    %v661 = vpack.c.b16 %v449, %v445
    %v662 = vpack.c.b16 %v450, %v446
    %v663 = vpack.c.b16 %v451, %v447
    %v664 = vpack.c.b16 %v456, %v452
    %v665 = vpack.c.b16 %v457, %v453
    %v666 = vpack.c.b16 %v458, %v454
    %v667 = vpack.c.b16 %v459, %v455
    %v668 = vpack.c.b16 %v464, %v460
    %v669 = vpack.c.b16 %v465, %v461
    %v670 = vpack.c.b16 %v466, %v462
    %v671 = vpack.c.b16 %v467, %v463
    %v672 = vpack.c.b16 %v472, %v468
    %v673 = vpack.c.b16 %v473, %v469
    %v674 = vpack.c.b16 %v474, %v470
    %v675 = vpack.c.b16 %v475, %v471
    %v676 = vpack.c.b16 %v480, %v476
    %v677 = vpack.c.b16 %v481, %v477
    %v678 = vpack.c.b16 %v482, %v478
    %v679 = vpack.c.b16 %v483, %v479
    %v680 = vpack.c.b16 %v488, %v484
    %v681 = vpack.c.b16 %v489, %v485
    %v682 = vpack.c.b16 %v490, %v486
    %v683 = vpack.c.b16 %v491, %v487
    %v684 = vpack.c.b16 %v496, %v492
    %v685 = vpack.c.b16 %v497, %v493
    %v686 = vpack.c.b16 %v498, %v494
    %v687 = vpack.c.b16 %v499, %v495
    %v688 = vpack.c.b16 %v504, %v500
    %v689 = vpack.c.b16 %v505, %v501
    %v690 = vpack.c.b16 %v506, %v502
    %v691 = vpack.c.b16 %v507, %v503
    %v692 = vpack.c.b16 %v512, %v508
    %v693 = vpack.c.b16 %v513, %v509
    %v694 = vpack.c.b16 %v514, %v510
    %v695 = vpack.c.b16 %v515, %v511
    %v696 = vpack.c.b16 %v520, %v516
    %v697 = vpack.c.b16 %v521, %v517
    %v698 = vpack.c.b16 %v522, %v518
    %v699 = vpack.c.b16 %v523, %v519
    %v700 = vpack.c.b16 %v528, %v524
    %v701 = vpack.c.b16 %v529, %v525
    %v702 = vpack.c.b16 %v530, %v526
    %v703 = vpack.c.b16 %v531, %v527
    %v704 = vpack.c.b16 %v536, %v532
    %v705 = vpack.c.b16 %v537, %v533
    %v706 = vpack.c.b16 %v538, %v534
    %v707 = vpack.c.b16 %v539, %v535
    %v708 = vpack.c.b16 %v544, %v540
    %v709 = vpack.c.b16 %v545, %v541
    %v710 = vpack.c.b16 %v546, %v542
    %v711 = vpack.c.b16 %v547, %v543
    %v712 = vpack.c.b16 %v552, %v548
    %v713 = vpack.c.b16 %v553, %v549
    %v714 = vpack.c.b16 %v554, %v550
    %v715 = vpack.c.b16 %v555, %v551
    %v716 = vpack.c.b16 %v560, %v556
    %v717 = vpack.c.b16 %v561, %v557
    %v718 = vpack.c.b16 %v562, %v558
    %v719 = vpack.c.b16 %v563, %v559
    %v720 = vpack.c.b16 %v568, %v564
    %v721 = vpack.c.b16 %v569, %v565
    %v722 = vpack.c.b16 %v570, %v566
    %v723 = vpack.c.b16 %v571, %v567
    %v724 = vpack.c.b16 %v576, %v572
    %v725 = vpack.c.b16 %v577, %v573
    %v726 = vpack.c.b16 %v578, %v574
    %v727 = vpack.c.b16 %v579, %v575
    %v728 = vpack.c.b16 %v584, %v580
    %v729 = vpack.c.b16 %v585, %v581
    %v730 = vpack.c.b16 %v586, %v582
    %v731 = vpack.c.b16 %v587, %v583
    %v732 = vpack.c.b16 %v592, %v588
    %v733 = vpack.c.b16 %v593, %v589
    %v734 = vpack.c.b16 %v594, %v590
    %v735 = vpack.c.b16 %v595, %v591
    %v736 = vpack.c.b16 %v600, %v596
    %v737 = vpack.c.b16 %v601, %v597
    %v738 = vpack.c.b16 %v602, %v598
    %v739 = vpack.c.b16 %v603, %v599
    %v740 = vpack.c.b16 %v608, %v604
    %v741 = vpack.c.b16 %v609, %v605
    %v742 = vpack.c.b16 %v610, %v606
    %v743 = vpack.c.b16 %v611, %v607
    %v744 = vpack.c.b16 %v616, %v612
    %v745 = vpack.c.b16 %v617, %v613
    %v746 = vpack.c.b16 %v618, %v614
    %v747 = vpack.c.b16 %v619, %v615
    %876 = vmatprep.subr.bf16.mxu0 %v621
    %877 = vmatpush1.bf16.msra.mxu0 %v620
    %878 = vmatprep.subr.bf16.mxu0 %v625
    %879 = vmatpush1.bf16.msra.mxu0 %v624
    %880 = vmatprep.subr.bf16.mxu0 %v629
    %881 = vmatpush1.bf16.msra.mxu0 %v628
    %882 = vmatprep.subr.bf16.mxu0 %v633
    %883 = vmatpush1.bf16.msra.mxu0 %v632
    %884 = vmatprep.subr.bf16.mxu0 %v637
    %885 = vmatpush1.bf16.msra.mxu0 %v636
    %886 = vmatprep.subr.bf16.mxu0 %v641
    %887 = vmatpush1.bf16.msra.mxu0 %v640
    %888 = vmatprep.subr.bf16.mxu0 %v645
    %889 = vmatpush1.bf16.msra.mxu0 %v644
    %890 = vmatprep.subr.bf16.mxu0 %v649
    %891 = vmatpush1.bf16.msra.mxu0 %v648
    %892 = vmatprep.subr.bf16.mxu0 %v653
    %893 = vmatpush1.bf16.msra.mxu0 %v652
    %894 = vmatprep.subr.bf16.mxu0 %v657
    %895 = vmatpush1.bf16.msra.mxu0 %v656
    %896 = vmatprep.subr.bf16.mxu0 %v661
    %897 = vmatpush1.bf16.msra.mxu0 %v660
    %898 = vmatprep.subr.bf16.mxu0 %v665
    %899 = vmatpush1.bf16.msra.mxu0 %v664
    %900 = vmatprep.subr.bf16.mxu0 %v669
    %901 = vmatpush1.bf16.msra.mxu0 %v668
    %902 = vmatprep.subr.bf16.mxu0 %v673
    %903 = vmatpush1.bf16.msra.mxu0 %v672
    %904 = vmatprep.subr.bf16.mxu0 %v677
    %905 = vmatpush1.bf16.msra.mxu0 %v676
    %906 = vmatprep.subr.bf16.mxu0 %v681
    %907 = vmatpush1.bf16.msra.mxu0 %v680
    %908 = vmatprep.mubr.bf16.mxu0 %v65
    %909 = vmatmul.mubr.bf16.gmra.mrb[0].mxu0 %v64
    %v910 = vpop.f32.mrb[0].mxu0
    %v911 = vadd.f32 %v223, %v910
    %v912 = vpop.f32.mrb[0].mxu0
    %v913 = vadd.f32 %v227, %v912
    %v914 = vpop.f32.mrb[0].mxu0
    %v915 = vadd.f32 %v223, %v914
    %v916 = vpop.f32.mrb[0].mxu0
    %v917 = vadd.f32 %v227, %v916
    %918 = vdwg.mxu0
    %919 = vmatprep.subr.bf16.mxu0 %v685
    %920 = vmatpush1.bf16.msra.mxu0 %v684
    %921 = vmatprep.subr.bf16.mxu0 %v689
    %922 = vmatpush1.bf16.msra.mxu0 %v688
    %923 = vmatprep.subr.bf16.mxu0 %v693
    %924 = vmatpush1.bf16.msra.mxu0 %v692
    %925 = vmatprep.subr.bf16.mxu0 %v697
    %926 = vmatpush1.bf16.msra.mxu0 %v696
    %927 = vmatprep.subr.bf16.mxu0 %v701
    %928 = vmatpush1.bf16.msra.mxu0 %v700
    %929 = vmatprep.subr.bf16.mxu0 %v705
    %930 = vmatpush1.bf16.msra.mxu0 %v704
    %931 = vmatprep.subr.bf16.mxu0 %v709
    %932 = vmatpush1.bf16.msra.mxu0 %v708
    %933 = vmatprep.subr.bf16.mxu0 %v713
    %934 = vmatpush1.bf16.msra.mxu0 %v712
    %935 = vmatprep.subr.bf16.mxu0 %v717
    %936 = vmatpush1.bf16.msra.mxu0 %v716
    %937 = vmatprep.subr.bf16.mxu0 %v721
    %938 = vmatpush1.bf16.msra.mxu0 %v720
    %939 = vmatprep.subr.bf16.mxu0 %v725
    %940 = vmatpush1.bf16.msra.mxu0 %v724
    %941 = vmatprep.subr.bf16.mxu0 %v729
    %942 = vmatpush1.bf16.msra.mxu0 %v728
    %943 = vmatprep.subr.bf16.mxu0 %v733
    %944 = vmatpush1.bf16.msra.mxu0 %v732
    %945 = vmatprep.subr.bf16.mxu0 %v737
    %946 = vmatpush1.bf16.msra.mxu0 %v736
    %947 = vmatprep.subr.bf16.mxu0 %v741
    %948 = vmatpush1.bf16.msra.mxu0 %v740
    %949 = vmatprep.subr.bf16.mxu0 %v745
    %950 = vmatpush1.bf16.msra.mxu0 %v744
    %951 = vmatprep.mubr.bf16.mxu0 %v67
    %952 = vmatmul.mubr.bf16.gmra.mrb[0].mxu0 %v66
    %v953 = vpop.f32.mrb[0].mxu0
    %v954 = vadd.f32 %v911, %v953
    %v955 = vpop.f32.mrb[0].mxu0
    %v956 = vadd.f32 %v913, %v955
    %v957 = vpop.f32.mrb[0].mxu0
    %v958 = vadd.f32 %v915, %v957
    %v959 = vpop.f32.mrb[0].mxu0
    %v960 = vadd.f32 %v917, %v959
    %961 = vdwg.mxu0
    %962 = vmatprep.subr.bf16.mxu0 %v623
    %963 = vmatpush1.bf16.msra.mxu0 %v622
    %964 = vmatprep.subr.bf16.mxu0 %v627
    %965 = vmatpush1.bf16.msra.mxu0 %v626
    %966 = vmatprep.subr.bf16.mxu0 %v631
    %967 = vmatpush1.bf16.msra.mxu0 %v630
    %968 = vmatprep.subr.bf16.mxu0 %v635
    %969 = vmatpush1.bf16.msra.mxu0 %v634
    %970 = vmatprep.subr.bf16.mxu0 %v639
    %971 = vmatpush1.bf16.msra.mxu0 %v638
    %972 = vmatprep.subr.bf16.mxu0 %v643
    %973 = vmatpush1.bf16.msra.mxu0 %v642
    %974 = vmatprep.subr.bf16.mxu0 %v647
    %975 = vmatpush1.bf16.msra.mxu0 %v646
    %976 = vmatprep.subr.bf16.mxu0 %v651
    %977 = vmatpush1.bf16.msra.mxu0 %v650
    %978 = vmatprep.subr.bf16.mxu0 %v655
    %979 = vmatpush1.bf16.msra.mxu0 %v654
    %980 = vmatprep.subr.bf16.mxu0 %v659
    %981 = vmatpush1.bf16.msra.mxu0 %v658
    %982 = vmatprep.subr.bf16.mxu0 %v663
    %983 = vmatpush1.bf16.msra.mxu0 %v662
    %984 = vmatprep.subr.bf16.mxu0 %v667
    %985 = vmatpush1.bf16.msra.mxu0 %v666
    %986 = vmatprep.subr.bf16.mxu0 %v671
    %987 = vmatpush1.bf16.msra.mxu0 %v670
    %988 = vmatprep.subr.bf16.mxu0 %v675
    %989 = vmatpush1.bf16.msra.mxu0 %v674
    %990 = vmatprep.subr.bf16.mxu0 %v679
    %991 = vmatpush1.bf16.msra.mxu0 %v678
    %992 = vmatprep.subr.bf16.mxu0 %v683
    %993 = vmatpush1.bf16.msra.mxu0 %v682
    %994 = vmatprep.mubr.bf16.mxu0 %v65
    %995 = vmatmul.mubr.bf16.gmra.mrb[0].mxu0 %v64
    %v996 = vpop.f32.mrb[0].mxu0
    %v997 = vadd.f32 %v231, %v996
    %v998 = vpop.f32.mrb[0].mxu0
    %v999 = vadd.f32 %v235, %v998
    %v1000 = vpop.f32.mrb[0].mxu0
    %v1001 = vadd.f32 %v231, %v1000
    %v1002 = vpop.f32.mrb[0].mxu0
    %v1003 = vadd.f32 %v235, %v1002
    %1004 = vdwg.mxu0
    %1005 = vmatprep.subr.bf16.mxu0 %v687
    %1006 = vmatpush1.bf16.msra.mxu0 %v686
    %1007 = vmatprep.subr.bf16.mxu0 %v691
    %1008 = vmatpush1.bf16.msra.mxu0 %v690
    %1009 = vmatprep.subr.bf16.mxu0 %v695
    %1010 = vmatpush1.bf16.msra.mxu0 %v694
    %1011 = vmatprep.subr.bf16.mxu0 %v699
    %1012 = vmatpush1.bf16.msra.mxu0 %v698
    %1013 = vmatprep.subr.bf16.mxu0 %v703
    %1014 = vmatpush1.bf16.msra.mxu0 %v702
    %1015 = vmatprep.subr.bf16.mxu0 %v707
    %1016 = vmatpush1.bf16.msra.mxu0 %v706
    %1017 = vmatprep.subr.bf16.mxu0 %v711
    %1018 = vmatpush1.bf16.msra.mxu0 %v710
    %1019 = vmatprep.subr.bf16.mxu0 %v715
    %1020 = vmatpush1.bf16.msra.mxu0 %v714
    %1021 = vmatprep.subr.bf16.mxu0 %v719
    %1022 = vmatpush1.bf16.msra.mxu0 %v718
    %1023 = vmatprep.subr.bf16.mxu0 %v723
    %1024 = vmatpush1.bf16.msra.mxu0 %v722
    %1025 = vmatprep.subr.bf16.mxu0 %v727
    %1026 = vmatpush1.bf16.msra.mxu0 %v726
    %1027 = vmatprep.subr.bf16.mxu0 %v731
    %1028 = vmatpush1.bf16.msra.mxu0 %v730
    %1029 = vmatprep.subr.bf16.mxu0 %v735
    %1030 = vmatpush1.bf16.msra.mxu0 %v734
    %1031 = vmatprep.subr.bf16.mxu0 %v739
    %1032 = vmatpush1.bf16.msra.mxu0 %v738
    %1033 = vmatprep.subr.bf16.mxu0 %v743
    %1034 = vmatpush1.bf16.msra.mxu0 %v742
    %1035 = vmatprep.subr.bf16.mxu0 %v747
    %1036 = vmatpush1.bf16.msra.mxu0 %v746
    %1037 = vmatprep.mubr.bf16.mxu0 %v67
    %1038 = vmatmul.mubr.bf16.gmra.mrb[0].mxu0 %v66
    %v1039 = vpop.f32.mrb[0].mxu0
    %v1040 = vadd.f32 %v997, %v1039
    %v1041 = vpop.f32.mrb[0].mxu0
    %v1042 = vadd.f32 %v999, %v1041
    %v1043 = vpop.f32.mrb[0].mxu0
    %v1044 = vadd.f32 %v1001, %v1043
    %v1045 = vpop.f32.mrb[0].mxu0
    %v1046 = vadd.f32 %v1003, %v1045
    %1047 = vdwg.mxu0
    %v1048 = vlaneseq
    %v1049 = vshrl.u32 %v1048, 7
    %v1050 = vadd.s32 %v1049, 8
    %v1051 = vlaneseq
    %v1052 = vand.u32 %v1051, 127
    %v1053 = vadd.s32 %v1052, 128
    %v1054 = vadd.s32 %v1052, 256
    %v1055 = vadd.s32 %v1052, 384
    %s1056 = smul.u32 0, 16
    %v1057 = vstv %s1056
    %v1058 = vadd.s32 %v1057, %v1049
    %v1059 = vadd.s32 %v1057, %v1050
    %v1060 = vmul.u32 %v1058, 512
    %v1061 = vmul.u32 %v1059, 512
    %v1062 = vadd.s32 %v1060, %v1052
    %v1063 = vadd.s32 %v1060, %v1053
    %v1064 = vadd.s32 %v1060, %v1054
    %v1065 = vadd.s32 %v1060, %v1055
    %v1066 = vadd.s32 %v1061, %v1052
    %v1067 = vadd.s32 %v1061, %v1053
    %v1068 = vadd.s32 %v1061, %v1054
    %v1069 = vadd.s32 %v1061, %v1055
    %s1070 = sld [smem:[#allocation3]]
    %s1071 = smul.u32 %s1070, 2654435769
    %v1072 = vstv %s1071
    %v1073 = vadd.s32 %v1062, %v1072
    %v1074 = vadd.s32 %v1063, %v1072
    %v1075 = vadd.s32 %v1064, %v1072
    %v1076 = vadd.s32 %v1065, %v1072
    %v1077 = vadd.s32 %v1066, %v1072
    %v1078 = vadd.s32 %v1067, %v1072
    %v1079 = vadd.s32 %v1068, %v1072
    %v1080 = vadd.s32 %v1069, %v1072
    %v1081 = vshrl.u32 %v1073, 16
    %v1082 = vshrl.u32 %v1074, 16
    %v1083 = vshrl.u32 %v1075, 16
    %v1084 = vshrl.u32 %v1076, 16
    %v1085 = vshrl.u32 %v1077, 16
    %v1086 = vshrl.u32 %v1078, 16
    %v1087 = vshrl.u32 %v1079, 16
    %v1088 = vshrl.u32 %v1080, 16
    %v1089 = vxor.u32 %v1073, %v1081
    %v1090 = vxor.u32 %v1074, %v1082
    %v1091 = vxor.u32 %v1075, %v1083
    %v1092 = vxor.u32 %v1076, %v1084
    %v1093 = vxor.u32 %v1077, %v1085
    %v1094 = vxor.u32 %v1078, %v1086
    %v1095 = vxor.u32 %v1079, %v1087
    %v1096 = vxor.u32 %v1080, %v1088
    %v1097 = vmul.u32 %v1089, 2146121005
    %v1098 = vmul.u32 %v1090, 2146121005
    %v1099 = vmul.u32 %v1091, 2146121005
    %v1100 = vmul.u32 %v1092, 2146121005
    %v1101 = vmul.u32 %v1093, 2146121005
    %v1102 = vmul.u32 %v1094, 2146121005
    %v1103 = vmul.u32 %v1095, 2146121005
    %v1104 = vmul.u32 %v1096, 2146121005
    %v1105 = vshrl.u32 %v1097, 15
    %v1106 = vshrl.u32 %v1098, 15
    %v1107 = vshrl.u32 %v1099, 15
    %v1108 = vshrl.u32 %v1100, 15
    %v1109 = vshrl.u32 %v1101, 15
    %v1110 = vshrl.u32 %v1102, 15
    %v1111 = vshrl.u32 %v1103, 15
    %v1112 = vshrl.u32 %v1104, 15
    %v1113 = vxor.u32 %v1097, %v1105
    %v1114 = vxor.u32 %v1098, %v1106
    %v1115 = vxor.u32 %v1099, %v1107
    %v1116 = vxor.u32 %v1100, %v1108
    %v1117 = vxor.u32 %v1101, %v1109
    %v1118 = vxor.u32 %v1102, %v1110
    %v1119 = vxor.u32 %v1103, %v1111
    %v1120 = vxor.u32 %v1104, %v1112
    %v1121 = vmul.u32 %v1113, 2221713035
    %v1122 = vmul.u32 %v1114, 2221713035
    %v1123 = vmul.u32 %v1115, 2221713035
    %v1124 = vmul.u32 %v1116, 2221713035
    %v1125 = vmul.u32 %v1117, 2221713035
    %v1126 = vmul.u32 %v1118, 2221713035
    %v1127 = vmul.u32 %v1119, 2221713035
    %v1128 = vmul.u32 %v1120, 2221713035
    %v1129 = vshrl.u32 %v1121, 16
    %v1130 = vshrl.u32 %v1122, 16
    %v1131 = vshrl.u32 %v1123, 16
    %v1132 = vshrl.u32 %v1124, 16
    %v1133 = vshrl.u32 %v1125, 16
    %v1134 = vshrl.u32 %v1126, 16
    %v1135 = vshrl.u32 %v1127, 16
    %v1136 = vshrl.u32 %v1128, 16
    %v1137 = vxor.u32 %v1121, %v1129
    %v1138 = vxor.u32 %v1122, %v1130
    %v1139 = vxor.u32 %v1123, %v1131
    %v1140 = vxor.u32 %v1124, %v1132
    %v1141 = vxor.u32 %v1125, %v1133
    %v1142 = vxor.u32 %v1126, %v1134
    %v1143 = vxor.u32 %v1127, %v1135
    %v1144 = vxor.u32 %v1128, %v1136
    %vm1145 = vcmp.ge.u32.totalorder %v1137, 429496730
    %vm1146 = vcmp.ge.u32.totalorder %v1138, 429496730
    %vm1147 = vcmp.ge.u32.totalorder %v1139, 429496730
    %vm1148 = vcmp.ge.u32.totalorder %v1140, 429496730
    %vm1149 = vcmp.ge.u32.totalorder %v1141, 429496730
    %vm1150 = vcmp.ge.u32.totalorder %v1142, 429496730
    %vm1151 = vcmp.ge.u32.totalorder %v1143, 429496730
    %vm1152 = vcmp.ge.u32.totalorder %v1144, 429496730
    %v1153 = vmul.f32 %v954, 1.1111112
    %v1154 = vmul.f32 %v956, 1.1111112
    %v1155 = vmul.f32 %v1040, 1.1111112
    %v1156 = vmul.f32 %v1042, 1.1111112
    %v1157 = vmul.f32 %v958, 1.1111112
    %v1158 = vmul.f32 %v960, 1.1111112
    %v1159 = vmul.f32 %v1044, 1.1111112
    %v1160 = vmul.f32 %v1046, 1.1111112
    %v1161 = vsel %vm1145, %v1153, 0.0
    %v1162 = vsel %vm1146, %v1154, 0.0
    %v1163 = vsel %vm1147, %v1155, 0.0
    %v1164 = vsel %vm1148, %v1156, 0.0
    %v1165 = vsel %vm1149, %v1157, 0.0
    %v1166 = vsel %vm1150, %v1158, 0.0
    %v1167 = vsel %vm1151, %v1159, 0.0
    %v1168 = vsel %vm1152, %v1160, 0.0
    %v1169 = vadd.f32 %v56, %v1161
    %v1170 = vadd.f32 %v57, %v1162
    %v1171 = vadd.f32 %v58, %v1163
    %v1172 = vadd.f32 %v59, %v1164
    %v1173 = vadd.f32 %v60, %v1165
    %v1174 = vadd.f32 %v61, %v1166
    %v1175 = vadd.f32 %v62, %v1167
    %v1176 = vadd.f32 %v63, %v1168
    %v1177 = vadd.f32 %v1169, %v1170
    %v1178 = vadd.f32 %v1177, %v1171
    %v1179 = vadd.f32 %v1178, %v1172
    %1180 = vadd.xlane.f32.xlu0 %v1179
    %v1181 = vpop.xlane.xlu0 %1180
    %v1182 = vadd.f32 %v1173, %v1174
    %v1183 = vadd.f32 %v1182, %v1175
    %v1184 = vadd.f32 %v1183, %v1176
    %1185 = vadd.xlane.f32.xlu0 %v1184
    %v1186 = vpop.xlane.xlu0 %1185
    %v1187 = vrcp.pop 512.0
    %v1188 = vmul.f32 %v1181, %v1187
    %v1189 = vmul.f32 %v1186, %v1187
    %v1190 = vsub.f32 %v1169, %v1188
    %v1191 = vsub.f32 %v1170, %v1188
    %v1192 = vsub.f32 %v1171, %v1188
    %v1193 = vsub.f32 %v1172, %v1188
    %v1194 = vsub.f32 %v1173, %v1189
    %v1195 = vsub.f32 %v1174, %v1189
    %v1196 = vsub.f32 %v1175, %v1189
    %v1197 = vsub.f32 %v1176, %v1189
    %v1198 = vmul.f32 %v1190, %v1190
    %v1199 = vmul.f32 %v1191, %v1191
    %v1200 = vmul.f32 %v1192, %v1192
    %v1201 = vmul.f32 %v1193, %v1193
    %v1202 = vmul.f32 %v1194, %v1194
    %v1203 = vmul.f32 %v1195, %v1195
    %v1204 = vmul.f32 %v1196, %v1196
    %v1205 = vmul.f32 %v1197, %v1197
    %v1206 = vadd.f32 %v1198, %v1199
    %v1207 = vadd.f32 %v1206, %v1200
    %v1208 = vadd.f32 %v1207, %v1201
    %1209 = vadd.xlane.f32.xlu0 %v1208
    %v1210 = vpop.xlane.xlu0 %1209
    %v1211 = vadd.f32 %v1202, %v1203
    %v1212 = vadd.f32 %v1211, %v1204
    %v1213 = vadd.f32 %v1212, %v1205
    %1214 = vadd.xlane.f32.xlu0 %v1213
    %v1215 = vpop.xlane.xlu0 %1214
    %v1216 = vmul.f32 %v1210, %v1187
    %v1217 = vmul.f32 %v1215, %v1187
    %v1218 = vadd.f32 %v1216, 1e-06
    %v1219 = vadd.f32 %v1217, 1e-06
    %v1220 = vrsqrt.pop %v1218
    %v1221 = vrsqrt.pop %v1219
    %v1222 = vmul.f32 %v1190, %v1220
    %v1223 = vmul.f32 %v1191, %v1220
    %v1224 = vmul.f32 %v1192, %v1220
    %v1225 = vmul.f32 %v1193, %v1220
    %v1226 = vmul.f32 %v1194, %v1221
    %v1227 = vmul.f32 %v1195, %v1221
    %v1228 = vmul.f32 %v1196, %v1221
    %v1229 = vmul.f32 %v1197, %v1221
    %v1230 = vlaneseq
    %v1231 = vshrl.u32 %v1230, 7
    %v1232 = vsub.s32 1, %v1231
    %v1233 = vrot.slane %v196, %v1232
    %v1234 = vlaneseq
    %v1235 = vshrl.u32 %v1234, 7
    %v1236 = vsub.s32 5, %v1235
    %v1237 = vrot.slane %v196, %v1236
    %v1238 = vlaneseq
    %v1239 = vshrl.u32 %v1238, 7
    %v1240 = vsub.s32 1, %v1239
    %v1241 = vrot.slane %v197, %v1240
    %v1242 = vlaneseq
    %v1243 = vshrl.u32 %v1242, 7
    %v1244 = vsub.s32 5, %v1243
    %v1245 = vrot.slane %v197, %v1244
    %v1250 = vlaneseq
    %v1251 = vshrl.u32 %v1250, 7
    %v1252 = vsub.s32 1, %v1251
    %v1253 = vrot.slane %v1233, %v1252
    %v1254 = vlaneseq
    %v1255 = vshrl.u32 %v1254, 7
    %v1256 = vsub.s32 1, %v1255
    %v1257 = vrot.slane %v1237, %v1256
    %v1258 = vlaneseq
    %v1259 = vshrl.u32 %v1258, 7
    %v1260 = vsub.s32 1, %v1259
    %v1261 = vrot.slane %v1241, %v1260
    %v1262 = vlaneseq
    %v1263 = vshrl.u32 %v1262, 7
    %v1264 = vsub.s32 1, %v1263
    %v1265 = vrot.slane %v1245, %v1264
    %v1266 = vmul.f32 %v1222, %v1253
    %v1267 = vmul.f32 %v1223, %v1257
    %v1268 = vmul.f32 %v1224, %v1261
    %v1269 = vmul.f32 %v1225, %v1265
    %v1270 = vmul.f32 %v1226, %v1253
    %v1271 = vmul.f32 %v1227, %v1257
    %v1272 = vmul.f32 %v1228, %v1261
    %v1273 = vmul.f32 %v1229, %v1265
    %v1274 = vlaneseq
    %v1275 = vshrl.u32 %v1274, 7
    %v1276 = vsub.s32 2, %v1275
    %v1277 = vrot.slane %v196, %v1276
    %v1278 = vlaneseq
    %v1279 = vshrl.u32 %v1278, 7
    %v1280 = vsub.s32 6, %v1279
    %v1281 = vrot.slane %v196, %v1280
    %v1282 = vlaneseq
    %v1283 = vshrl.u32 %v1282, 7
    %v1284 = vsub.s32 2, %v1283
    %v1285 = vrot.slane %v197, %v1284
    %v1286 = vlaneseq
    %v1287 = vshrl.u32 %v1286, 7
    %v1288 = vsub.s32 6, %v1287
    %v1289 = vrot.slane %v197, %v1288
    %v1294 = vlaneseq
    %v1295 = vshrl.u32 %v1294, 7
    %v1296 = vsub.s32 2, %v1295
    %v1297 = vrot.slane %v1277, %v1296
    %v1298 = vlaneseq
    %v1299 = vshrl.u32 %v1298, 7
    %v1300 = vsub.s32 2, %v1299
    %v1301 = vrot.slane %v1281, %v1300
    %v1302 = vlaneseq
    %v1303 = vshrl.u32 %v1302, 7
    %v1304 = vsub.s32 2, %v1303
    %v1305 = vrot.slane %v1285, %v1304
    %v1306 = vlaneseq
    %v1307 = vshrl.u32 %v1306, 7
    %v1308 = vsub.s32 2, %v1307
    %v1309 = vrot.slane %v1289, %v1308
    %v1310 = vadd.f32 %v1266, %v1297
    %v1311 = vadd.f32 %v1267, %v1301
    %v1312 = vadd.f32 %v1268, %v1305
    %v1313 = vadd.f32 %v1269, %v1309
    %v1314 = vadd.f32 %v1270, %v1297
    %v1315 = vadd.f32 %v1271, %v1301
    %v1316 = vadd.f32 %v1272, %v1305
    %v1317 = vadd.f32 %v1273, %v1309
    %1318 = vst [vmem:[#allocation10] sm:$0xff] %v1310
    %1319 = vst [vmem:[#allocation10 + $0x8] sm:$0xff] %v1311
    %1320 = vst [vmem:[#allocation10 + $0x10] sm:$0xff] %v1312
    %1321 = vst [vmem:[#allocation10 + $0x18] sm:$0xff] %v1313
    %1322 = vst [vmem:[#allocation10 + $0x20] sm:$0xff] %v1314
    %1323 = vst [vmem:[#allocation10 + $0x28] sm:$0xff] %v1315
    %1324 = vst [vmem:[#allocation10 + $0x30] sm:$0xff] %v1316
    %1325 = vst [vmem:[#allocation10 + $0x38] sm:$0xff] %v1317
    // Predicated region
    $region26: #{tpu_custom_call.1} parent=1 // pred_check
      _
    $region27: #{tpu_custom_call.1} parent=1 // pred_check_branch
      %1327 = sbr.rel (0) target = $region29
    $region28: #{tpu_custom_call.1} parent=1 // pred_region
      %s1329 = ssub.s32 1024, 1024
      %1330 = vsyncadd [#allocation6], %s1329
      %s1331 = sshll.u32 [#allocation10], 4
      %s1332 = int_to_ptr.vmem [resolvable:$true] %s1331
      %1337 = dma.vmem_to_hbm [thread:$0]  %s1332, 1024, %s4, [#allocation6], 512, 512, 32
    $region29: #{tpu_custom_call.1} parent=1 // pred_fallthru
      _
    // Predicated region
    $region30: #{tpu_custom_call.1} parent=1 // pred_check
      _
    $region31: #{tpu_custom_call.1} parent=1 // pred_check_branch
      %1339 = sbr.rel (0) target = $region33
    $region32: #{tpu_custom_call.1} parent=1 // pred_region
      %1340 = dma.done [#allocation6], 1024
    $region33: #{tpu_custom_call.1} parent=1 // pred_fallthru
      _
    %1341 = vsyncpa [#allocation5], 1
    %1342 = vsyncpa [#allocation8], 1
    %1343 = vsyncpa [#allocation6], 1

</llo_original>
